<compile_context>
chip_gen: v7x
topology: tpu7x:2x2x1
jax: 0.10.0
libtpu: 0.0.40
codegen_flags: <defaults>
</compile_context>

<pallas_src>
import functools

import jax
import jax.numpy as jnp
from jax.experimental import pallas as pl
from jax.experimental.pallas import tpu as pltpu


def _round_up(v, m):
    return ((v + m - 1) // m) * m


def _gsa_kernel(xin_ref, batch_ref, w1_ref, b1_ref, w2_ref, b2_ref, out_ref, *,
                n_points, tile_n, num_batches, pool_dtype, row_chunk):
    """One point tile of the per-point MLP + running segment max.

    xin_ref:   [TN, Kp]    compute dtype (concat([x, pos]) zero-padded to Kp)
    batch_ref: [TN, 1]     int32 batch id per point (0 for padded rows)
    w1_ref:    [Kp, H1p]   compute dtype
    b1_ref:    [1, H1p]    f32
    w2_ref:    [H1p, H2p]  compute dtype
    b2_ref:    [1, H2p]    f32
    out_ref:   [Bp, H2p]   f32 running max, resident across inner grid steps
                           (one private slab per outer / core grid index)
    """
    step = pl.program_id(1)

    @pl.when(step == 0)
    def _init():
        # 0 is a valid identity for the running max ONLY because the MLP ends
        # in a ReLU (h >= 0).  Empty batches therefore pool to 0 (not -inf).
        out_ref[...] = jnp.zeros_like(out_ref)

    # --- per-point MLP (MXU with f32 accumulation; bias/ReLU in f32) --------
    h = (jnp.dot(xin_ref[...], w1_ref[...], preferred_element_type=jnp.float32)
         + b1_ref[...])
    h = jnp.maximum(h, 0.0)
    h = (jnp.dot(h.astype(w2_ref.dtype), w2_ref[...],
                 preferred_element_type=jnp.float32)
         + b2_ref[...])
    h = jnp.maximum(h, 0.0)                                   # [TN, H2p], >= 0

    # --- mask padded / out-of-range rows ONCE --------------------------------
    # Padded rows carry padded batch ids; zeroing their activations here makes
    # them neutral for the max regardless of the id they carry.
    row0 = (pl.program_id(0) * pl.num_programs(1) + step) * tile_n
    rows = row0 + jax.lax.broadcasted_iota(jnp.int32, (tile_n, 1), 0)
    h0 = jnp.where(rows < n_points, h, 0.0).astype(pool_dtype)   # [TN, H2p]
    bidx = batch_ref[...]                                        # [TN, 1]

    # --- running segment max: chunked loop interchange ----------------------
    h2p = out_ref.shape[-1]
    zero = jnp.zeros((), pool_dtype)
    seg = [jnp.zeros((1, h2p), jnp.float32) for _ in range(num_batches)]

    nchunks = -(-tile_n // row_chunk)
    for ci in range(nchunks):                       # static, unrolled
        lo = ci * row_chunk
        hi = min(lo + row_chunk, tile_n)
        hc = h0[lo:hi]                              # [chunk, H2p] slab, reused
        bc = bidx[lo:hi]                            # [chunk, 1]   for all B
        for b in range(num_batches):
            m = bc == b
            s = jnp.max(jnp.where(m, hc, zero), axis=0, keepdims=True)
            seg[b] = jnp.maximum(seg[b], s.astype(jnp.float32))

    # Commit per-row maxima with static ref slices (no concatenate relayout).
    for b in range(num_batches):
        out_ref[b:b + 1, :] = jnp.maximum(out_ref[b:b + 1, :], seg[b])


def _device_kind():
    try:
        return jax.devices()[0].device_kind.lower()
    except Exception:
        return ""


def global_set_abstraction(x, pos, batch, params, num_batches, *,
                           tile_n=4096, compute_dtype=jnp.bfloat16,
                           num_cores=None, row_chunk=128):
    """x: [N, C], pos: [N, 3], batch: [N] int32 (values in [0, num_batches)).

    params = (w1 [C+3, H1], b1 [1, H1], w2 [H1, H2], b2 [1, H2]).
    Returns (pooled [B, H2] f32, pos_out [B, 3], batch_out [B]).
    """
    w1, b1, w2, b2 = params
    n, c = x.shape
    din = c + 3
    h1 = w1.shape[1]
    h2 = w2.shape[1]
    h1p = _round_up(h1, 128)
    h2p = _round_up(h2, 128)
    kp = _round_up(din, 8)
    bp = _round_up(num_batches, 8)          # sublane-dense accumulator rows
    f32 = jnp.float32

    kind = _device_kind()
    if num_cores is None:
        num_cores = 2 if "v7" in kind else 1     # 2 TensorCores per chip on v7x
    # bf16 VALU exists on v6e/v7x; keep pooling in f32 on v5* (emulated bf16).
    is_bf16 = jnp.dtype(compute_dtype) == jnp.dtype(jnp.bfloat16)
    pool_dtype = compute_dtype if (is_bf16 and "v5" not in kind) else f32

    # Point tile, rounded to 16 for bf16 sublane packing.
    tn = min(_round_up(tile_n, 16), _round_up(n, 16))
    tiles_per_core = pl.cdiv(pl.cdiv(n, tn), num_cores)
    n_pad = num_cores * tiles_per_core * tn          # all kernel reads in-bounds

    # Zero-pad hidden dims to 128 lanes and K to 8 sublanes.  Padding is exact:
    # padded columns stay 0 through both ReLUs and are sliced off below.
    w1_pad = jnp.zeros((kp, h1p), f32).at[:din, :h1].set(w1.astype(f32))
    b1_pad = jnp.zeros((1, h1p), f32).at[:, :h1].set(jnp.reshape(b1, (1, h1)).astype(f32))
    w2_pad = jnp.zeros((h1p, h2p), f32).at[:h1, :h2].set(w2.astype(f32))
    b2_pad = jnp.zeros((1, h2p), f32).at[:, :h2].set(jnp.reshape(b2, (1, h2)).astype(f32))
    w1_c = w1_pad.astype(compute_dtype)
    w2_c = w2_pad.astype(compute_dtype)

    # Single contiguous [N_pad, Kp] input (concat + pad + cast in one pass;
    # this replaces the previous per-array astype passes, not an extra trip).
    xin = jnp.zeros((n_pad, kp), f32)
    xin = xin.at[:n, :c].set(x.astype(f32))
    xin = xin.at[:n, c:din].set(pos.astype(f32))
    xin_c = xin.astype(compute_dtype)
    batch_2d = jnp.zeros((n_pad, 1), jnp.int32).at[:n, 0].set(batch.astype(jnp.int32))

    kernel = functools.partial(
        _gsa_kernel, n_points=n, tile_n=tn, num_batches=num_batches,
        pool_dtype=pool_dtype, row_chunk=min(row_chunk, tn))

    pooled_pad = pl.pallas_call(
        kernel,
        out_shape=jax.ShapeDtypeStruct((num_cores, bp, h2p), jnp.float32),
        grid=(num_cores, tiles_per_core),
        in_specs=[
            pl.BlockSpec((tn, kp), lambda cc, i: (cc * tiles_per_core + i, 0)),  # points
            pl.BlockSpec((tn, 1), lambda cc, i: (cc * tiles_per_core + i, 0)),   # batch ids
            pl.BlockSpec((kp, h1p), lambda cc, i: (0, 0)),                       # W1, resident
            pl.BlockSpec((1, h1p), lambda cc, i: (0, 0)),                        # b1, resident
            pl.BlockSpec((h1p, h2p), lambda cc, i: (0, 0)),                      # W2, resident
            pl.BlockSpec((1, h2p), lambda cc, i: (0, 0)),                        # b2, resident
        ],
        # Per-core private accumulator slab, resident across the inner axis.
        out_specs=pl.BlockSpec((None, bp, h2p), lambda cc, i: (cc, 0, 0)),
        compiler_params=pltpu.CompilerParams(
            dimension_semantics=("parallel", "arbitrary"),
            vmem_limit_bytes=32 * 1024 * 1024,   # modest; safe on v5e/v6e/v7x
        ),
    )(xin_c, batch_2d, w1_c, b1_pad, w2_c, b2_pad)

    pooled = jnp.max(pooled_pad, axis=0)[:num_batches, :h2]   # combine cores, unpad
    pos_out = jnp.zeros((num_batches, 3), dtype=pos.dtype)
    batch_out = jnp.arange(num_batches, dtype=batch.dtype)
    return pooled, pos_out, batch_out


def _reference(x, pos, batch, params, num_batches):
    """Pure-JAX f32 reference for correctness checking."""
    w1, b1, w2, b2 = params
    xin = jnp.concatenate([x, pos], axis=1)
    h = jnp.maximum(xin @ w1 + jnp.reshape(b1, (1, -1)), 0.0)
    h = jnp.maximum(h @ w2 + jnp.reshape(b2, (1, -1)), 0.0)
    mask = batch[:, None] == jnp.arange(num_batches)[None, :]
    masked = jnp.where(mask[:, :, None], h[:, None, :], -jnp.inf)
    return jnp.max(masked, axis=0)


if __name__ == "__main__":
    # Small deterministic example: N=200 points (forces multiple tiles with a
    # partial last tile at tile_n=128), B=2 batches with interleaved ids,
    # C=4 features, nn = Linear(7->32) + ReLU + Linear(32->32) + ReLU.
    N, B, C, H1, H2 = 200, 2, 4, 32, 32
    DIN = C + 3

    key = jax.random.PRNGKey(0)
    k_x, k_pos, k_w1, k_b1, k_w2, k_b2 = jax.random.split(key, 6)

    x = jax.random.normal(k_x, (N, C), dtype=jnp.float32)
    pos = jax.random.normal(k_pos, (N, 3), dtype=jnp.float32)
    batch = jnp.arange(N, dtype=jnp.int32) % B      # unsorted / interleaved ids

    params = (
        jax.random.normal(k_w1, (DIN, H1), dtype=jnp.float32) * 0.1,
        jax.random.normal(k_b1, (1, H1), dtype=jnp.float32) * 0.1,
        jax.random.normal(k_w2, (H1, H2), dtype=jnp.float32) * 0.1,
        jax.random.normal(k_b2, (1, H2), dtype=jnp.float32) * 0.1,
    )

    ref = _reference(x, pos, batch, params, B)

    # f32 compute path, small tiles (exercises partial tiles + accumulation).
    x32, p32, b32 = global_set_abstraction(x, pos, batch, params, B,
                                           tile_n=128, compute_dtype=jnp.float32)
    jax.block_until_ready((x32, p32, b32))
    assert x32.shape == (B, H2)
    assert p32.shape == (B, 3) and bool(jnp.all(p32 == 0))
    assert bool(jnp.all(b32 == jnp.arange(B)))
    assert jnp.allclose(x32, ref, atol=1e-5, rtol=1e-5)

    # f32 path with an explicit 2-way core split (correctness of per-core
    # accumulators + wrapper max-combine, regardless of device generation).
    x2c, _, _ = global_set_abstraction(x, pos, batch, params, B,
                                       tile_n=128, compute_dtype=jnp.float32,
                                       num_cores=2)
    jax.block_until_ready(x2c)
    assert jnp.allclose(x2c, ref, atol=1e-5, rtol=1e-5)

    # Default config: large tile, bf16 compute (halved HBM traffic, bf16 MXU,
    # bf16 pooling on v6e/v7x).  Looser tolerance.
    xbf, _, _ = global_set_abstraction(x, pos, batch, params, B)
    jax.block_until_ready(xbf)
    assert jnp.allclose(xbf, ref, atol=3e-2, rtol=3e-2)

    print("KERNEL_OK")
</pallas_src>

<mosaic_0001>
module attributes {stable_mosaic.version = 11 : i64} {
  func.func @_gsa_kernel(%arg0: i32, %arg1: i32, %arg2: memref<128x8xf32, #tpu.memory_space<vmem>>, %arg3: memref<128x1xi32, #tpu.memory_space<vmem>>, %arg4: memref<8x128xf32, #tpu.memory_space<vmem>>, %arg5: memref<1x128xf32, #tpu.memory_space<vmem>>, %arg6: memref<128x128xf32, #tpu.memory_space<vmem>>, %arg7: memref<1x128xf32, #tpu.memory_space<vmem>>, %arg8: memref<1x8x128xf32, #tpu.memory_space<vmem>>) attributes {dimension_semantics = [#tpu.dimension_semantics<parallel>, #tpu.dimension_semantics<arbitrary>], iteration_bounds = array<i64: 1, 2>, scalar_prefetch = 0 : i64, scratch_operands = 0 : i64, tpu.core_type = #tpu.core_type<tc>, window_params = [{transform_indices = @transform_0, window_bounds = array<i64: 128, 8>}, {transform_indices = @transform_1, window_bounds = array<i64: 128, 1>}, {pipeline_mode = #tpu.pipeline_mode<synchronous>, transform_indices = @transform_2, window_bounds = array<i64: 8, 128>}, {pipeline_mode = #tpu.pipeline_mode<synchronous>, transform_indices = @transform_3, window_bounds = array<i64: 1, 128>}, {pipeline_mode = #tpu.pipeline_mode<synchronous>, transform_indices = @transform_4, window_bounds = array<i64: 128, 128>}, {pipeline_mode = #tpu.pipeline_mode<synchronous>, transform_indices = @transform_5, window_bounds = array<i64: 1, 128>}, {transform_indices = @transform_6, window_bounds = array<i64: 1, 8, 128>}]} {
    %c0_i32 = arith.constant 0 : i32
    %0 = arith.cmpi eq, %arg1, %c0_i32 : i32
    %1 = arith.extui %0 : i1 to i32
    %c0_i32_0 = arith.constant 0 : i32
    %2 = arith.cmpi ne, %1, %c0_i32_0 : i32
    scf.if %2 {
      %cst_34 = arith.constant 0.000000e+00 : f32
      %63 = vector.broadcast %cst_34 : f32 to vector<8x128xf32>
      %c0_35 = arith.constant 0 : index
      %c0_36 = arith.constant 0 : index
      %c0_37 = arith.constant 0 : index
      %64 = vector.load %arg8[%c0_35, %c0_36, %c0_37] : memref<1x8x128xf32, #tpu.memory_space<vmem>>, vector<1x8x128xf32>
      %65 = vector.shape_cast %64 : vector<1x8x128xf32> to vector<8x128xf32>
      %66 = vector.shape_cast %63 : vector<8x128xf32> to vector<1x8x128xf32>
      tpu.vector_store %arg8[%c0_35, %c0_36, %c0_37], %66 {strides = array<i32>} : memref<1x8x128xf32, #tpu.memory_space<vmem>>, vector<1x8x128xf32>,
    } else {
    }
    %c0 = arith.constant 0 : index
    %c0_1 = arith.constant 0 : index
    %3 = vector.load %arg2[%c0, %c0_1] : memref<128x8xf32, #tpu.memory_space<vmem>>, vector<128x8xf32>
    %c0_2 = arith.constant 0 : index
    %c0_3 = arith.constant 0 : index
    %4 = vector.load %arg4[%c0_2, %c0_3] : memref<8x128xf32, #tpu.memory_space<vmem>>, vector<8x128xf32>
    %cst = arith.constant dense<0.000000e+00> : vector<128x128xf32>
    %5 = tpu.matmul %3, %4, %cst {dimension_numbers = #tpu.dot_dimension_numbers<[1], [0], [0], [1], [0, 0, 1, 1], [], []>} : vector<128x8xf32>, vector<8x128xf32>, vector<128x128xf32> -> vector<128x128xf32>
    %c0_4 = arith.constant 0 : index
    %c0_5 = arith.constant 0 : index
    %6 = vector.load %arg5[%c0_4, %c0_5] : memref<1x128xf32, #tpu.memory_space<vmem>>, vector<1x128xf32>
    %7 = vector.broadcast %6 : vector<1x128xf32> to vector<128x128xf32>
    %8 = arith.addf %5, %7 : vector<128x128xf32>
    %cst_6 = arith.constant 0.000000e+00 : f32
    %9 = vector.broadcast %cst_6 : f32 to vector<128x128xf32>
    %10 = arith.maximumf %8, %9 : vector<128x128xf32>
    %c0_7 = arith.constant 0 : index
    %c0_8 = arith.constant 0 : index
    %11 = vector.load %arg6[%c0_7, %c0_8] : memref<128x128xf32, #tpu.memory_space<vmem>>, vector<128x128xf32>
    %cst_9 = arith.constant dense<0.000000e+00> : vector<128x128xf32>
    %12 = tpu.matmul %10, %11, %cst_9 {dimension_numbers = #tpu.dot_dimension_numbers<[1], [0], [0], [1], [0, 0, 1, 1], [], []>} : vector<128x128xf32>, vector<128x128xf32>, vector<128x128xf32> -> vector<128x128xf32>
    %c0_10 = arith.constant 0 : index
    %c0_11 = arith.constant 0 : index
    %13 = vector.load %arg7[%c0_10, %c0_11] : memref<1x128xf32, #tpu.memory_space<vmem>>, vector<1x128xf32>
    %14 = vector.broadcast %13 : vector<1x128xf32> to vector<128x128xf32>
    %15 = arith.addf %12, %14 : vector<128x128xf32>
    %cst_12 = arith.constant 0.000000e+00 : f32
    %16 = vector.broadcast %cst_12 : f32 to vector<128x128xf32>
    %17 = arith.maximumf %15, %16 : vector<128x128xf32>
    %c2_i32 = arith.constant 2 : i32
    %18 = arith.muli %arg0, %c2_i32 : i32
    %19 = arith.addi %18, %arg1 : i32
    %c128_i32 = arith.constant 128 : i32
    %20 = arith.muli %19, %c128_i32 : i32
    %21 = tpu.iota {dimensions = array<i32: 0>} : vector<128x1xi32>
    %22 = vector.broadcast %20 : i32 to vector<128x1xi32>
    %23 = arith.addi %22, %21 : vector<128x1xi32>
    %c200_i32 = arith.constant 200 : i32
    %24 = vector.broadcast %c200_i32 : i32 to vector<128x1xi32>
    %25 = arith.cmpi slt, %23, %24 : vector<128x1xi32>
    %cst_13 = arith.constant 0.000000e+00 : f32
    %26 = vector.shape_cast %25 : vector<128x1xi1> to vector<128x1xi1>
    %27 = vector.broadcast %26 : vector<128x1xi1> to vector<128x128xi1>
    %28 = vector.broadcast %cst_13 : f32 to vector<128x128xf32>
    %29 = arith.select %27, %17, %28 : vector<128x128xi1>, vector<128x128xf32>
    %c0_14 = arith.constant 0 : index
    %c0_15 = arith.constant 0 : index
    %30 = vector.load %arg3[%c0_14, %c0_15] : memref<128x1xi32, #tpu.memory_space<vmem>>, vector<128x1xi32>
    %cst_16 = arith.constant 0.000000e+00 : f32
    %31 = vector.broadcast %cst_16 : f32 to vector<1x128xf32>
    %cst_17 = arith.constant 0.000000e+00 : f32
    %32 = vector.broadcast %cst_17 : f32 to vector<1x128xf32>
    %c0_i32_18 = arith.constant 0 : i32
    %33 = vector.broadcast %c0_i32_18 : i32 to vector<128x1xi32>
    %34 = arith.cmpi eq, %30, %33 : vector<128x1xi32>
    %cst_19 = arith.constant 0.000000e+00 : f32
    %35 = vector.shape_cast %34 : vector<128x1xi1> to vector<128x1xi1>
    %36 = vector.broadcast %35 : vector<128x1xi1> to vector<128x128xi1>
    %37 = vector.broadcast %cst_19 : f32 to vector<128x128xf32>
    %38 = arith.select %36, %29, %37 : vector<128x128xi1>, vector<128x128xf32>
    %cst_20 = arith.constant dense<0xFF800000> : vector<128xf32>
    %39 = vector.multi_reduction <maximumf>, %38, %cst_20 [0] : vector<128x128xf32> to vector<128xf32>
    %40 = vector.shape_cast %39 : vector<128xf32> to vector<1x128xf32>
    %41 = arith.maximumf %31, %40 : vector<1x128xf32>
    %c1_i32 = arith.constant 1 : i32
    %42 = vector.broadcast %c1_i32 : i32 to vector<128x1xi32>
    %43 = arith.cmpi eq, %30, %42 : vector<128x1xi32>
    %cst_21 = arith.constant 0.000000e+00 : f32
    %44 = vector.shape_cast %43 : vector<128x1xi1> to vector<128x1xi1>
    %45 = vector.broadcast %44 : vector<128x1xi1> to vector<128x128xi1>
    %46 = vector.broadcast %cst_21 : f32 to vector<128x128xf32>
    %47 = arith.select %45, %29, %46 : vector<128x128xi1>, vector<128x128xf32>
    %cst_22 = arith.constant dense<0xFF800000> : vector<128xf32>
    %48 = vector.multi_reduction <maximumf>, %47, %cst_22 [0] : vector<128x128xf32> to vector<128xf32>
    %49 = vector.shape_cast %48 : vector<128xf32> to vector<1x128xf32>
    %50 = arith.maximumf %32, %49 : vector<1x128xf32>
    %c0_23 = arith.constant 0 : index
    %c0_24 = arith.constant 0 : index
    %c0_25 = arith.constant 0 : index
    %51 = vector.load %arg8[%c0_23, %c0_24, %c0_25] : memref<1x8x128xf32, #tpu.memory_space<vmem>>, vector<1x1x128xf32>
    %52 = vector.shape_cast %51 : vector<1x1x128xf32> to vector<1x128xf32>
    %53 = arith.maximumf %52, %41 : vector<1x128xf32>
    %c0_26 = arith.constant 0 : index
    %c0_27 = arith.constant 0 : index
    %c0_28 = arith.constant 0 : index
    %54 = vector.load %arg8[%c0_26, %c0_27, %c0_28] : memref<1x8x128xf32, #tpu.memory_space<vmem>>, vector<1x1x128xf32>
    %55 = vector.shape_cast %54 : vector<1x1x128xf32> to vector<1x128xf32>
    %56 = vector.shape_cast %53 : vector<1x128xf32> to vector<1x1x128xf32>
    tpu.vector_store %arg8[%c0_26, %c0_27, %c0_28], %56 {strides = array<i32>} : memref<1x8x128xf32, #tpu.memory_space<vmem>>, vector<1x1x128xf32>,
    %c0_29 = arith.constant 0 : index
    %c1 = arith.constant 1 : index
    %c0_30 = arith.constant 0 : index
    %57 = vector.load %arg8[%c0_29, %c1, %c0_30] : memref<1x8x128xf32, #tpu.memory_space<vmem>>, vector<1x1x128xf32>
    %58 = vector.shape_cast %57 : vector<1x1x128xf32> to vector<1x128xf32>
    %59 = arith.maximumf %58, %50 : vector<1x128xf32>
    %c0_31 = arith.constant 0 : index
    %c1_32 = arith.constant 1 : index
    %c0_33 = arith.constant 0 : index
    %60 = vector.load %arg8[%c0_31, %c1_32, %c0_33] : memref<1x8x128xf32, #tpu.memory_space<vmem>>, vector<1x1x128xf32>
    %61 = vector.shape_cast %60 : vector<1x1x128xf32> to vector<1x128xf32>
    %62 = vector.shape_cast %59 : vector<1x128xf32> to vector<1x1x128xf32>
    tpu.vector_store %arg8[%c0_31, %c1_32, %c0_33], %62 {strides = array<i32>} : memref<1x8x128xf32, #tpu.memory_space<vmem>>, vector<1x1x128xf32>,
    return
  }
  func.func @transform_0(%arg0: i32, %arg1: i32) -> (i32, i32) {
    %c2_i32 = arith.constant 2 : i32
    %0 = arith.muli %arg0, %c2_i32 : i32
    %1 = arith.addi %0, %arg1 : i32
    %c0_i32 = arith.constant 0 : i32
    %c0_i32_0 = arith.constant 0 : i32
    return %1, %c0_i32 : i32, i32
  }
  func.func @transform_1(%arg0: i32, %arg1: i32) -> (i32, i32) {
    %c2_i32 = arith.constant 2 : i32
    %0 = arith.muli %arg0, %c2_i32 : i32
    %1 = arith.addi %0, %arg1 : i32
    %c0_i32 = arith.constant 0 : i32
    %c0_i32_0 = arith.constant 0 : i32
    return %1, %c0_i32 : i32, i32
  }
  func.func @transform_2(%arg0: i32, %arg1: i32) -> (i32, i32) {
    %c0_i32 = arith.constant 0 : i32
    %c0_i32_0 = arith.constant 0 : i32
    %c0_i32_1 = arith.constant 0 : i32
    return %c0_i32, %c0_i32_0 : i32, i32
  }
  func.func @transform_3(%arg0: i32, %arg1: i32) -> (i32, i32) {
    %c0_i32 = arith.constant 0 : i32
    %c0_i32_0 = arith.constant 0 : i32
    %c0_i32_1 = arith.constant 0 : i32
    return %c0_i32, %c0_i32_0 : i32, i32
  }
  func.func @transform_4(%arg0: i32, %arg1: i32) -> (i32, i32) {
    %c0_i32 = arith.constant 0 : i32
    %c0_i32_0 = arith.constant 0 : i32
    %c0_i32_1 = arith.constant 0 : i32
    return %c0_i32, %c0_i32_0 : i32, i32
  }
  func.func @transform_5(%arg0: i32, %arg1: i32) -> (i32, i32) {
    %c0_i32 = arith.constant 0 : i32
    %c0_i32_0 = arith.constant 0 : i32
    %c0_i32_1 = arith.constant 0 : i32
    return %c0_i32, %c0_i32_0 : i32, i32
  }
  func.func @transform_6(%arg0: i32, %arg1: i32) -> (i32, i32, i32) {
    %c0_i32 = arith.constant 0 : i32
    %c0_i32_0 = arith.constant 0 : i32
    %c0_i32_1 = arith.constant 0 : i32
    return %arg0, %c0_i32, %c0_i32_0 : i32, i32, i32
  }
}

</mosaic_0001>

<llo_original>
// kernel: tpu_custom_call.1
$region0: #{tpu_custom_call.1}
  #allocation0 [shape = 'u32[]', space=smem, size = 0x4, offset = 0x4, fixed_abs, tag = 'smem constant byte address 0x4 - core index']
  #allocation1 [shape = 'u32[144,128]{1,0:T(1,128)}', space=vmem, size = 0x12000, scoped, tag = 'internal scratch']
  %s0 = inlined_call_operand.vmem [shape: f32[256,8], index: 0, kind: input, shape index: {}]
  %s1 = inlined_call_operand.vmem [shape: s32[256,1], index: 1, kind: input, shape index: {}]
  %s2 = inlined_call_operand.vmem [shape: f32[8,128], index: 2, kind: input, shape index: {}]
  %s3 = inlined_call_operand.vmem [shape: f32[1,128], index: 3, kind: input, shape index: {}]
  %s4 = inlined_call_operand.vmem [shape: f32[128,128], index: 4, kind: input, shape index: {}]
  %s5 = inlined_call_operand.vmem [shape: f32[1,128], index: 5, kind: input, shape index: {}]
  %s6 = inlined_call_operand.hbm [shape: f32[1,8,128], index: 6, kind: output, shape index: {}]
  %s7 = sld [smem:[#allocation0]]
  $region61: #{tpu_custom_call.1} parent=0
    _
  %s9 = ssub.s32 1, %s7
  %s10 = scalar_select 0, %s9, %s7
  $region1: #{tpu_custom_call.1} parent=0
    #allocation2 [shape = 'u8[4096]{0}', space=vmem, size = 0x1000, scoped, tag = 'output window, operand 0, single buffered']
    #allocation3 [shape = 's32[2]{0}', space=sflag, size = 0x8, scoped, tag = 'scoped memory for tpu_custom_call.1']
    %11 = vsyncpa [#allocation3], 0
    loop: start=0, step=1, limit=4
    $region2: #{tpu_custom_call.1} parent=1 // loop_pre_header
      _
    $region3: #{tpu_custom_call.1} parent=1 // loop_header
      %s13 = sphi 0, %s17
      %p14 = scmp.ge.s32.totalorder %s13, 4
      %s20 = sphi 0, %s32
      %s21 = sphi 0, %s28
      %s22 = sphi 0, %s20
      %s23 = sphi 0, %s21
      %s24 = sphi 0, %s22
      %s25 = sphi 0, %s23
      %s39 = sphi 0, %s41
      %s42 = sphi 0, %s39
      %s43 = sphi 0, %s42
      %s59 = sphi 0, %s43
      %s69 = sphi 0, %s71
      %s72 = sphi 0, %s69
      %s73 = sphi 0, %s72
      %s89 = sphi 0, %s73
      %s93 = sphi 0, %s93
      %s95 = sphi 0, %s93
      %s96 = sphi 0, %s95
      %s110 = sphi 0, %s96
      %s114 = sphi 0, %s114
      %s116 = sphi 0, %s114
      %s117 = sphi 0, %s116
      %s131 = sphi 0, %s117
      %s135 = sphi 0, %s135
      %s137 = sphi 0, %s135
      %s138 = sphi 0, %s137
      %s152 = sphi 0, %s138
      %s156 = sphi 0, %s156
      %s158 = sphi 0, %s156
      %s159 = sphi 0, %s158
      %s173 = sphi 0, %s159
      %s179 = sphi 0, %s181
      %s182 = sphi 0, %s179
      %s183 = sphi 0, %s182
      %s199 = sphi 0, %s183
    $region4: #{tpu_custom_call.1} parent=1 // loop_header_branch
      %16 = sbr.rel (%p14) target = $region8
    $region5: #{tpu_custom_call.1} parent=1 // loop_body
      %s18 = ssub.s32 %s13, 1
      %s19 = ssub.s32 %s13, 2
      %s26 = sadd.s32 1, %s21
      %p27 = scmp.ge.s32.totalorder %s26, 2
      %s28 = scalar_select %p27, 0, %s26
      %s29 = sadd.s32 1, %s20
      %s30 = scalar_select %p27, %s29, %s20
      %p31 = scmp.ge.s32.totalorder %s30, 1
      %s32 = scalar_select %p31, 0, %s30
      %s33 = smul.u32 %s20, 2
      %s34 = sadd.s32 %s33, %s21
      %s35 = smul.u32 %s32, 2
      %s36 = sadd.s32 %s35, %s28
      %s37 = ssub.s32 %s34, %s36
      %p38 = scmp.eq.s32.totalorder %s37, 0
      %s40 = sadd.s32 %s39, 1
      %s41 = scalar_select %p38, %s39, %s40
      %p44 = pneg %p38
      %p45 = scmp.eq.s32.totalorder %s13, 1
      %p46 = por %p44, %p45
      %p47 = scmp.ne.s32.totalorder %s39, %s42
      %p48 = scmp.eq.s32.totalorder %s13, 0
      %p49 = por %p47, %p48
      %p50 = scmp.ne.s32.totalorder %s39, %s42
      %p51 = scmp.eq.s32.totalorder %s18, 1
      %p52 = por %p50, %p51
      %p53 = scmp.ne.s32.totalorder %s42, %s43
      %p54 = scmp.eq.s32.totalorder %s18, 0
      %p55 = por %p53, %p54
      %p56 = scmp.ne.s32.totalorder %s42, %s43
      %p57 = scmp.eq.s32.totalorder %s19, 1
      %p58 = por %p56, %p57
      %p60 = scmp.ne.s32.totalorder %s43, %s59
      %p61 = scmp.eq.s32.totalorder %s19, 0
      %p62 = por %p60, %p61
      %s63 = smul.u32 %s20, 2
      %s64 = sadd.s32 %s63, %s21
      %s65 = smul.u32 %s32, 2
      %s66 = sadd.s32 %s65, %s28
      %s67 = ssub.s32 %s64, %s66
      %p68 = scmp.eq.s32.totalorder %s67, 0
      %s70 = sadd.s32 %s69, 1
      %s71 = scalar_select %p68, %s69, %s70
      %p74 = pneg %p68
      %p75 = scmp.eq.s32.totalorder %s13, 1
      %p76 = por %p74, %p75
      %p77 = scmp.ne.s32.totalorder %s69, %s72
      %p78 = scmp.eq.s32.totalorder %s13, 0
      %p79 = por %p77, %p78
      %p80 = scmp.ne.s32.totalorder %s69, %s72
      %p81 = scmp.eq.s32.totalorder %s18, 1
      %p82 = por %p80, %p81
      %p83 = scmp.ne.s32.totalorder %s72, %s73
      %p84 = scmp.eq.s32.totalorder %s18, 0
      %p85 = por %p83, %p84
      %p86 = scmp.ne.s32.totalorder %s72, %s73
      %p87 = scmp.eq.s32.totalorder %s19, 1
      %p88 = por %p86, %p87
      %p90 = scmp.ne.s32.totalorder %s73, %s89
      %p91 = scmp.eq.s32.totalorder %s19, 0
      %p92 = por %p90, %p91
      %s94 = sadd.s32 %s93, 1
      %p97 = scmp.eq.s32.totalorder %s13, 1
      %p98 = scmp.ne.s32.totalorder %s93, %s95
      %p99 = scmp.eq.s32.totalorder %s13, 0
      %p100 = por %p98, %p99
      %p101 = scmp.ne.s32.totalorder %s93, %s95
      %p102 = scmp.eq.s32.totalorder %s18, 1
      %p103 = por %p101, %p102
      %p104 = scmp.ne.s32.totalorder %s95, %s96
      %p105 = scmp.eq.s32.totalorder %s18, 0
      %p106 = por %p104, %p105
      %p107 = scmp.ne.s32.totalorder %s95, %s96
      %p108 = scmp.eq.s32.totalorder %s19, 1
      %p109 = por %p107, %p108
      %p111 = scmp.ne.s32.totalorder %s96, %s110
      %p112 = scmp.eq.s32.totalorder %s19, 0
      %p113 = por %p111, %p112
      %s115 = sadd.s32 %s114, 1
      %p118 = scmp.eq.s32.totalorder %s13, 1
      %p119 = scmp.ne.s32.totalorder %s114, %s116
      %p120 = scmp.eq.s32.totalorder %s13, 0
      %p121 = por %p119, %p120
      %p122 = scmp.ne.s32.totalorder %s114, %s116
      %p123 = scmp.eq.s32.totalorder %s18, 1
      %p124 = por %p122, %p123
      %p125 = scmp.ne.s32.totalorder %s116, %s117
      %p126 = scmp.eq.s32.totalorder %s18, 0
      %p127 = por %p125, %p126
      %p128 = scmp.ne.s32.totalorder %s116, %s117
      %p129 = scmp.eq.s32.totalorder %s19, 1
      %p130 = por %p128, %p129
      %p132 = scmp.ne.s32.totalorder %s117, %s131
      %p133 = scmp.eq.s32.totalorder %s19, 0
      %p134 = por %p132, %p133
      %s136 = sadd.s32 %s135, 1
      %p139 = scmp.eq.s32.totalorder %s13, 1
      %p140 = scmp.ne.s32.totalorder %s135, %s137
      %p141 = scmp.eq.s32.totalorder %s13, 0
      %p142 = por %p140, %p141
      %p143 = scmp.ne.s32.totalorder %s135, %s137
      %p144 = scmp.eq.s32.totalorder %s18, 1
      %p145 = por %p143, %p144
      %p146 = scmp.ne.s32.totalorder %s137, %s138
      %p147 = scmp.eq.s32.totalorder %s18, 0
      %p148 = por %p146, %p147
      %p149 = scmp.ne.s32.totalorder %s137, %s138
      %p150 = scmp.eq.s32.totalorder %s19, 1
      %p151 = por %p149, %p150
      %p153 = scmp.ne.s32.totalorder %s138, %s152
      %p154 = scmp.eq.s32.totalorder %s19, 0
      %p155 = por %p153, %p154
      %s157 = sadd.s32 %s156, 1
      %p160 = scmp.eq.s32.totalorder %s13, 1
      %p161 = scmp.ne.s32.totalorder %s156, %s158
      %p162 = scmp.eq.s32.totalorder %s13, 0
      %p163 = por %p161, %p162
      %p164 = scmp.ne.s32.totalorder %s156, %s158
      %p165 = scmp.eq.s32.totalorder %s18, 1
      %p166 = por %p164, %p165
      %p167 = scmp.ne.s32.totalorder %s158, %s159
      %p168 = scmp.eq.s32.totalorder %s18, 0
      %p169 = por %p167, %p168
      %p170 = scmp.ne.s32.totalorder %s158, %s159
      %p171 = scmp.eq.s32.totalorder %s19, 1
      %p172 = por %p170, %p171
      %p174 = scmp.ne.s32.totalorder %s159, %s173
      %p175 = scmp.eq.s32.totalorder %s19, 0
      %p176 = por %p174, %p175
      %s177 = ssub.s32 %s20, %s32
      %p178 = scmp.eq.s32.totalorder %s177, 0
      %s180 = sadd.s32 %s179, 1
      %s181 = scalar_select %p178, %s179, %s180
      %p184 = pneg %p178
      %p185 = scmp.eq.s32.totalorder %s13, 1
      %p186 = por %p184, %p185
      %p187 = scmp.ne.s32.totalorder %s179, %s182
      %p188 = scmp.eq.s32.totalorder %s13, 0
      %p189 = por %p187, %p188
      %p190 = scmp.ne.s32.totalorder %s179, %s182
      %p191 = scmp.eq.s32.totalorder %s18, 1
      %p192 = por %p190, %p191
      %p193 = scmp.ne.s32.totalorder %s182, %s183
      %p194 = scmp.eq.s32.totalorder %s18, 0
      %p195 = por %p193, %p194
      %p196 = scmp.ne.s32.totalorder %s182, %s183
      %p197 = scmp.eq.s32.totalorder %s19, 1
      %p198 = por %p196, %p197
      %p200 = scmp.ne.s32.totalorder %s183, %s199
      %p201 = scmp.eq.s32.totalorder %s19, 0
      %p202 = por %p200, %p201
      %p203 = scmp.le.s32.totalorder 1, %s13
      %p204 = scmp.lt.s32.totalorder %s13, 3
      %p205 = pnand %p203, %p204
      %p206 = pneg %p205
      // Predicated region
      $region9: #{tpu_custom_call.1} parent=5 // pred_check
        _
      $region10: #{tpu_custom_call.1} parent=5 // pred_check_branch
        %208 = sbr.rel (%p205) target = $region12
      $region11: #{tpu_custom_call.1} parent=5 // pred_region
        %s209 = ssub.s32 %s13, 1
        // Predicated region
        $region13: #{tpu_custom_call.1} parent=11 // pred_check
          %p210 = pneg %p106
        $region14: #{tpu_custom_call.1} parent=11 // pred_check_branch
          %212 = sbr.rel (%p210) target = $region16
        $region15: #{tpu_custom_call.1} parent=11 // pred_region
          _
        $region16: #{tpu_custom_call.1} parent=11 // pred_fallthru
          _
        // Predicated region
        $region17: #{tpu_custom_call.1} parent=11 // pred_check
          %p213 = pneg %p127
        $region18: #{tpu_custom_call.1} parent=11 // pred_check_branch
          %215 = sbr.rel (%p213) target = $region20
        $region19: #{tpu_custom_call.1} parent=11 // pred_region
          _
        $region20: #{tpu_custom_call.1} parent=11 // pred_fallthru
          _
        // Predicated region
        $region21: #{tpu_custom_call.1} parent=11 // pred_check
          %p216 = pneg %p148
        $region22: #{tpu_custom_call.1} parent=11 // pred_check_branch
          %218 = sbr.rel (%p216) target = $region24
        $region23: #{tpu_custom_call.1} parent=11 // pred_region
          _
        $region24: #{tpu_custom_call.1} parent=11 // pred_fallthru
          _
        // Predicated region
        $region25: #{tpu_custom_call.1} parent=11 // pred_check
          %p219 = pneg %p169
        $region26: #{tpu_custom_call.1} parent=11 // pred_check_branch
          %221 = sbr.rel (%p219) target = $region28
        $region27: #{tpu_custom_call.1} parent=11 // pred_region
          _
        $region28: #{tpu_custom_call.1} parent=11 // pred_fallthru
          _
      $region12: #{tpu_custom_call.1} parent=5 // pred_fallthru
        _
      %p222 = scmp.lt.s32.totalorder %s13, 2
      // Predicated region
      $region29: #{tpu_custom_call.1} parent=5 // pred_check
        %p223 = pneg %p222
      $region30: #{tpu_custom_call.1} parent=5 // pred_check_branch
        %225 = sbr.rel (%p223) target = $region32
      $region31: #{tpu_custom_call.1} parent=5 // pred_region
        // Predicated region
        $region33: #{tpu_custom_call.1} parent=31 // pred_check
          %p226 = pneg %p49
        $region34: #{tpu_custom_call.1} parent=31 // pred_check_branch
          %228 = sbr.rel (%p226) target = $region36
        $region35: #{tpu_custom_call.1} parent=31 // pred_region
          %s229 = smul.u32 %s20, 2
          %s230 = sadd.s32 %s229, %s21
          %s231 = smul.u32 16, %s230
          %p232 = scmp.lt.s32.totalorder %s231, 31
          %s233 = scalar_select %p232, %s231, 31
          %s234 = smul.addr %s233, 8
          %s235 = scalar_lea.vmem %s0, %s234
          %s236 = smul.u32 %s20, 2
          %s237 = sadd.s32 %s236, %s21
          %s238 = smul.u32 16, %s237
        $region36: #{tpu_custom_call.1} parent=31 // pred_fallthru
          _
        // Predicated region
        $region37: #{tpu_custom_call.1} parent=31 // pred_check
          %p239 = pneg %p79
        $region38: #{tpu_custom_call.1} parent=31 // pred_check_branch
          %241 = sbr.rel (%p239) target = $region40
        $region39: #{tpu_custom_call.1} parent=31 // pred_region
          %s242 = smul.u32 %s20, 2
          %s243 = sadd.s32 %s242, %s21
          %s244 = smul.u32 16, %s243
          %p245 = scmp.lt.s32.totalorder %s244, 31
          %s246 = scalar_select %p245, %s244, 31
          %s247 = smul.addr %s246, 8
          %s248 = scalar_lea.vmem %s1, %s247
          %s249 = smul.u32 %s20, 2
          %s250 = sadd.s32 %s249, %s21
          %s251 = smul.u32 16, %s250
        $region40: #{tpu_custom_call.1} parent=31 // pred_fallthru
          _
      $region32: #{tpu_custom_call.1} parent=5 // pred_fallthru
        _
      %p252 = scmp.le.s32.totalorder 1, %s13
      %p253 = scmp.lt.s32.totalorder %s13, 3
      %p254 = pnand %p252, %p253
      %p255 = pneg %p254
      // Predicated region
      $region41: #{tpu_custom_call.1} parent=5 // pred_check
        _
      $region42: #{tpu_custom_call.1} parent=5 // pred_check_branch
        %257 = sbr.rel (%p254) target = $region44
      $region43: #{tpu_custom_call.1} parent=5 // pred_region
        %s258 = ssub.s32 %s13, 1
        %s259 = smul.u32 %s22, 2
        %s260 = sadd.s32 %s259, %s23
        %s261 = smul.u32 16, %s260
        %p262 = scmp.lt.s32.totalorder %s261, 31
        %s263 = scalar_select %p262, %s261, 31
        %s264 = smul.addr %s263, 8
        %s265 = scalar_lea.vmem %s0, %s264
        %p266 = pneg %p55
        %p267 = pneg %p52
        %s268 = smul.u32 %s22, 2
        %s269 = sadd.s32 %s268, %s23
        %s270 = smul.u32 16, %s269
        %p271 = scmp.lt.s32.totalorder %s270, 31
        %s272 = scalar_select %p271, %s270, 31
        %s273 = smul.addr %s272, 8
        %s274 = scalar_lea.vmem %s1, %s273
        %p275 = pneg %p85
        %p276 = pneg %p82
        %p277 = pneg %p106
        %p278 = pneg %p103
        %p279 = pneg %p127
        %p280 = pneg %p124
        %p281 = pneg %p148
        %p282 = pneg %p145
        %p283 = pneg %p169
        %p284 = pneg %p166
        %p285 = pneg %p195
        %p286 = pneg %p192
        %s287 = smul.u32 %s22, 2
        %s288 = sadd.s32 %s287, %s23
        %s289 = smul.u32 16, %s288
        %p290 = scmp.lt.s32.totalorder %s289, 31
        %s291 = scalar_select %p290, %s289, 31
        %s292 = smul.addr %s291, 8
        %s293 = scalar_lea.vmem %s0, %s292
        %s294 = smul.u32 %s22, 2
        %s295 = sadd.s32 %s294, %s23
        %s296 = smul.u32 16, %s295
        %s297 = smul.u32 %s22, 2
        %s298 = sadd.s32 %s297, %s23
        %s299 = smul.u32 16, %s298
        %p300 = scmp.lt.s32.totalorder %s299, 31
        %s301 = scalar_select %p300, %s299, 31
        %s302 = smul.addr %s301, 8
        %s303 = scalar_lea.vmem %s1, %s302
        %s304 = smul.u32 %s22, 2
        %s305 = sadd.s32 %s304, %s23
        %s306 = smul.u32 16, %s305
        %p307 = scmp.eq.s32.totalorder %s23, 0
        // Predicated region
        $region45: #{tpu_custom_call.1} parent=43 // pred_check
          %p308 = pneg %p307
        $region46: #{tpu_custom_call.1} parent=43 // pred_check_branch
          %310 = sbr.rel (%p308) target = $region48
        $region47: #{tpu_custom_call.1} parent=43 // pred_region
          %311 = vst [vmem:[#allocation2] sm:$0xff] 0.0
        $region48: #{tpu_custom_call.1} parent=43 // pred_fallthru
          _
        %v312 = vld [vmem:[%s293] sm:$0xff]
        %v313 = vld [vmem:[%s293 + $0x8] sm:$0xff]
        %v314 = vld [vmem:[%s293 + $0x10] sm:$0xff]
        %v315 = vld [vmem:[%s293 + $0x18] sm:$0xff]
        %v316 = vld [vmem:[%s293 + $0x20] sm:$0xff]
        %v317 = vld [vmem:[%s293 + $0x28] sm:$0xff]
        %v318 = vld [vmem:[%s293 + $0x30] sm:$0xff]
        %v319 = vld [vmem:[%s293 + $0x38] sm:$0xff]
        %v320 = vld [vmem:[%s293 + $0x40] sm:$0xff]
        %v321 = vld [vmem:[%s293 + $0x48] sm:$0xff]
        %v322 = vld [vmem:[%s293 + $0x50] sm:$0xff]
        %v323 = vld [vmem:[%s293 + $0x58] sm:$0xff]
        %v324 = vld [vmem:[%s293 + $0x60] sm:$0xff]
        %v325 = vld [vmem:[%s293 + $0x68] sm:$0xff]
        %v326 = vld [vmem:[%s293 + $0x70] sm:$0xff]
        %v327 = vld [vmem:[%s293 + $0x78] sm:$0xff]
        %v328 = vld [vmem:[%s2] sm:$0xff]
        %v329 = vld [vmem:[%s3] sm:$0x1]
        %v331 = vlaneseq
        %v332 = vshrl.u32 %v331, 7
        %v333 = vsub.s32 0, %v332
        %v334 = vrot.slane %v329, %v333
        %vm336 = vcmask 64512
        %v338 = vsel %vm336, %v312, 0
        %v341 = vsel %vm336, %v313, 0
        %v344 = vsel %vm336, %v314, 0
        %v347 = vsel %vm336, %v315, 0
        %v350 = vsel %vm336, %v316, 0
        %v353 = vsel %vm336, %v317, 0
        %v356 = vsel %vm336, %v318, 0
        %v359 = vsel %vm336, %v319, 0
        %v362 = vsel %vm336, %v320, 0
        %v365 = vsel %vm336, %v321, 0
        %v368 = vsel %vm336, %v322, 0
        %v371 = vsel %vm336, %v323, 0
        %v374 = vsel %vm336, %v324, 0
        %v377 = vsel %vm336, %v325, 0
        %v380 = vsel %vm336, %v326, 0
        %v383 = vsel %vm336, %v327, 0
        %385 = vmatprep.subr.mxu0 0.0
        %386 = vmatpush1.msra.mxu0 %v328
        %387 = vmatprep.subr.mxu0 0.0
        %388 = vmatpush1.msra.mxu0 0.0
        %389 = vmatprep.subr.mxu0 0.0
        %390 = vmatpush1.msra.mxu0 0.0
        %391 = vmatprep.subr.mxu0 0.0
        %392 = vmatpush1.msra.mxu0 0.0
        %393 = vmatprep.subr.mxu0 0.0
        %394 = vmatpush1.msra.mxu0 0.0
        %395 = vmatprep.subr.mxu0 0.0
        %396 = vmatpush1.msra.mxu0 0.0
        %397 = vmatprep.subr.mxu0 0.0
        %398 = vmatpush1.msra.mxu0 0.0
        %399 = vmatprep.subr.mxu0 0.0
        %400 = vmatpush1.msra.mxu0 0.0
        %401 = vmatprep.subr.mxu0 0.0
        %402 = vmatpush1.msra.mxu0 0.0
        %403 = vmatprep.subr.mxu0 0.0
        %404 = vmatpush1.msra.mxu0 0.0
        %405 = vmatprep.subr.mxu0 0.0
        %406 = vmatpush1.msra.mxu0 0.0
        %407 = vmatprep.subr.mxu0 0.0
        %408 = vmatpush1.msra.mxu0 0.0
        %409 = vmatprep.subr.mxu0 0.0
        %410 = vmatpush1.msra.mxu0 0.0
        %411 = vmatprep.subr.mxu0 0.0
        %412 = vmatpush1.msra.mxu0 0.0
        %413 = vmatprep.subr.mxu0 0.0
        %414 = vmatpush1.msra.mxu0 0.0
        %415 = vmatprep.subr.mxu0 0.0
        %416 = vmatpush1.msra.mxu0 0.0
        %417 = vmatprep.subr.mxu0 0.0
        %418 = vmatpush1.msra.mxu0 0.0
        %419 = vmatprep.subr.mxu0 0.0
        %420 = vmatpush1.msra.mxu0 0.0
        %421 = vmatprep.subr.mxu0 0.0
        %422 = vmatpush1.msra.mxu0 0.0
        %423 = vmatprep.subr.mxu0 0.0
        %424 = vmatpush1.msra.mxu0 0.0
        %425 = vmatprep.subr.mxu0 0.0
        %426 = vmatpush1.msra.mxu0 0.0
        %427 = vmatprep.subr.mxu0 0.0
        %428 = vmatpush1.msra.mxu0 0.0
        %429 = vmatprep.subr.mxu0 0.0
        %430 = vmatpush1.msra.mxu0 0.0
        %431 = vmatprep.subr.mxu0 0.0
        %432 = vmatpush1.msra.mxu0 0.0
        %433 = vmatprep.subr.mxu0 0.0
        %434 = vmatpush1.msra.mxu0 0.0
        %435 = vmatprep.subr.mxu0 0.0
        %436 = vmatpush1.msra.mxu0 0.0
        %437 = vmatprep.subr.mxu0 0.0
        %438 = vmatpush1.msra.mxu0 0.0
        %439 = vmatprep.subr.mxu0 0.0
        %440 = vmatpush1.msra.mxu0 0.0
        %441 = vmatprep.subr.mxu0 0.0
        %442 = vmatpush1.msra.mxu0 0.0
        %443 = vmatprep.subr.mxu0 0.0
        %444 = vmatpush1.msra.mxu0 0.0
        %445 = vmatprep.subr.mxu0 0.0
        %446 = vmatpush1.msra.mxu0 0.0
        %447 = vmatprep.subr.mxu0 0.0
        %448 = vmatpush1.msra.mxu0 0.0
        %449 = vmatprep.mubr.f32.mxu0 0.0
        %450 = vmatmul.mubr.f32.gmra.mrb[0].mxu0 %v338
        %v451 = vpop.f32.mrb[0].mxu0
        %v452 = vadd.f32 %v334, %v451
        %v453 = vpop.f32.mrb[0].mxu0
        %454 = vmatprep.mubr.f32.mxu0 0.0
        %455 = vmatmul.mubr.f32.gmra.mrb[0].mxu0 %v341
        %v456 = vpop.f32.mrb[0].mxu0
        %v457 = vadd.f32 %v334, %v456
        %v458 = vpop.f32.mrb[0].mxu0
        %459 = vmatprep.mubr.f32.mxu0 0.0
        %460 = vmatmul.mubr.f32.gmra.mrb[0].mxu0 %v344
        %v461 = vpop.f32.mrb[0].mxu0
        %v462 = vadd.f32 %v334, %v461
        %v463 = vpop.f32.mrb[0].mxu0
        %464 = vmatprep.mubr.f32.mxu0 0.0
        %465 = vmatmul.mubr.f32.gmra.mrb[0].mxu0 %v347
        %v466 = vpop.f32.mrb[0].mxu0
        %v467 = vadd.f32 %v334, %v466
        %v468 = vpop.f32.mrb[0].mxu0
        %469 = vmatprep.mubr.f32.mxu0 0.0
        %470 = vmatmul.mubr.f32.gmra.mrb[0].mxu0 %v350
        %v471 = vpop.f32.mrb[0].mxu0
        %v472 = vadd.f32 %v334, %v471
        %v473 = vpop.f32.mrb[0].mxu0
        %474 = vmatprep.mubr.f32.mxu0 0.0
        %475 = vmatmul.mubr.f32.gmra.mrb[0].mxu0 %v353
        %v476 = vpop.f32.mrb[0].mxu0
        %v477 = vadd.f32 %v334, %v476
        %v478 = vpop.f32.mrb[0].mxu0
        %479 = vmatprep.mubr.f32.mxu0 0.0
        %480 = vmatmul.mubr.f32.gmra.mrb[0].mxu0 %v356
        %v481 = vpop.f32.mrb[0].mxu0
        %v482 = vadd.f32 %v334, %v481
        %v483 = vpop.f32.mrb[0].mxu0
        %484 = vmatprep.mubr.f32.mxu0 0.0
        %485 = vmatmul.mubr.f32.gmra.mrb[0].mxu0 %v359
        %v486 = vpop.f32.mrb[0].mxu0
        %v487 = vadd.f32 %v334, %v486
        %v488 = vpop.f32.mrb[0].mxu0
        %489 = vmatprep.mubr.f32.mxu0 0.0
        %490 = vmatmul.mubr.f32.gmra.mrb[0].mxu0 %v362
        %v491 = vpop.f32.mrb[0].mxu0
        %v492 = vadd.f32 %v334, %v491
        %v493 = vpop.f32.mrb[0].mxu0
        %494 = vmatprep.mubr.f32.mxu0 0.0
        %495 = vmatmul.mubr.f32.gmra.mrb[0].mxu0 %v365
        %v496 = vpop.f32.mrb[0].mxu0
        %v497 = vadd.f32 %v334, %v496
        %v498 = vpop.f32.mrb[0].mxu0
        %499 = vmatprep.mubr.f32.mxu0 0.0
        %500 = vmatmul.mubr.f32.gmra.mrb[0].mxu0 %v368
        %v501 = vpop.f32.mrb[0].mxu0
        %v502 = vadd.f32 %v334, %v501
        %v503 = vpop.f32.mrb[0].mxu0
        %504 = vmatprep.mubr.f32.mxu0 0.0
        %505 = vmatmul.mubr.f32.gmra.mrb[0].mxu0 %v371
        %v506 = vpop.f32.mrb[0].mxu0
        %v507 = vadd.f32 %v334, %v506
        %v508 = vpop.f32.mrb[0].mxu0
        %509 = vmatprep.mubr.f32.mxu0 0.0
        %510 = vmatmul.mubr.f32.gmra.mrb[0].mxu0 %v374
        %v511 = vpop.f32.mrb[0].mxu0
        %v512 = vadd.f32 %v334, %v511
        %v513 = vpop.f32.mrb[0].mxu0
        %514 = vmatprep.mubr.f32.mxu0 0.0
        %515 = vmatmul.mubr.f32.gmra.mrb[0].mxu0 %v377
        %v516 = vpop.f32.mrb[0].mxu0
        %v517 = vadd.f32 %v334, %v516
        %v518 = vpop.f32.mrb[0].mxu0
        %519 = vmatprep.mubr.f32.mxu0 0.0
        %520 = vmatmul.mubr.f32.gmra.mrb[0].mxu0 %v380
        %v521 = vpop.f32.mrb[0].mxu0
        %v522 = vadd.f32 %v334, %v521
        %v523 = vpop.f32.mrb[0].mxu0
        %524 = vmatprep.mubr.f32.mxu0 0.0
        %525 = vmatmul.mubr.f32.gmra.mrb[0].mxu0 %v383
        %v526 = vpop.f32.mrb[0].mxu0
        %v527 = vadd.f32 %v334, %v526
        %v528 = vpop.f32.mrb[0].mxu0
        %529 = vdwg.mxu0
        %v530 = vmax.f32 %v452, 0.0
        %v531 = vmax.f32 %v457, 0.0
        %v532 = vmax.f32 %v462, 0.0
        %v533 = vmax.f32 %v467, 0.0
        %v534 = vmax.f32 %v472, 0.0
        %v535 = vmax.f32 %v477, 0.0
        %v536 = vmax.f32 %v482, 0.0
        %v537 = vmax.f32 %v487, 0.0
        %v538 = vmax.f32 %v492, 0.0
        %v539 = vmax.f32 %v497, 0.0
        %v540 = vmax.f32 %v502, 0.0
        %v541 = vmax.f32 %v507, 0.0
        %v542 = vmax.f32 %v512, 0.0
        %v543 = vmax.f32 %v517, 0.0
        %v544 = vmax.f32 %v522, 0.0
        %v545 = vmax.f32 %v527, 0.0
        %v546 = vld [vmem:[%s4] sm:$0xff]
        %v547 = vld [vmem:[%s4 + $0x8] sm:$0xff]
        %v548 = vld [vmem:[%s4 + $0x10] sm:$0xff]
        %v549 = vld [vmem:[%s4 + $0x18] sm:$0xff]
        %v550 = vld [vmem:[%s4 + $0x20] sm:$0xff]
        %v551 = vld [vmem:[%s4 + $0x28] sm:$0xff]
        %v552 = vld [vmem:[%s4 + $0x30] sm:$0xff]
        %v553 = vld [vmem:[%s4 + $0x38] sm:$0xff]
        %v554 = vld [vmem:[%s4 + $0x40] sm:$0xff]
        %v555 = vld [vmem:[%s4 + $0x48] sm:$0xff]
        %v556 = vld [vmem:[%s4 + $0x50] sm:$0xff]
        %v557 = vld [vmem:[%s4 + $0x58] sm:$0xff]
        %v558 = vld [vmem:[%s4 + $0x60] sm:$0xff]
        %v559 = vld [vmem:[%s4 + $0x68] sm:$0xff]
        %v560 = vld [vmem:[%s4 + $0x70] sm:$0xff]
        %v561 = vld [vmem:[%s4 + $0x78] sm:$0xff]
        %v562 = vld [vmem:[%s5] sm:$0x1]
        %v564 = vlaneseq
        %v565 = vshrl.u32 %v564, 7
        %v566 = vsub.s32 0, %v565
        %v567 = vrot.slane %v562, %v566
        %569 = vmatprep.subr.mxu0 0.0
        %570 = vmatpush1.msra.mxu0 %v546
        %571 = vmatprep.subr.mxu0 0.0
        %572 = vmatpush1.msra.mxu0 %v547
        %573 = vmatprep.subr.mxu0 0.0
        %574 = vmatpush1.msra.mxu0 %v548
        %575 = vmatprep.subr.mxu0 0.0
        %576 = vmatpush1.msra.mxu0 %v549
        %577 = vmatprep.subr.mxu0 0.0
        %578 = vmatpush1.msra.mxu0 %v550
        %579 = vmatprep.subr.mxu0 0.0
        %580 = vmatpush1.msra.mxu0 %v551
        %581 = vmatprep.subr.mxu0 0.0
        %582 = vmatpush1.msra.mxu0 %v552
        %583 = vmatprep.subr.mxu0 0.0
        %584 = vmatpush1.msra.mxu0 %v553
        %585 = vmatprep.subr.mxu0 0.0
        %586 = vmatpush1.msra.mxu0 %v554
        %587 = vmatprep.subr.mxu0 0.0
        %588 = vmatpush1.msra.mxu0 %v555
        %589 = vmatprep.subr.mxu0 0.0
        %590 = vmatpush1.msra.mxu0 %v556
        %591 = vmatprep.subr.mxu0 0.0
        %592 = vmatpush1.msra.mxu0 %v557
        %593 = vmatprep.subr.mxu0 0.0
        %594 = vmatpush1.msra.mxu0 %v558
        %595 = vmatprep.subr.mxu0 0.0
        %596 = vmatpush1.msra.mxu0 %v559
        %597 = vmatprep.subr.mxu0 0.0
        %598 = vmatpush1.msra.mxu0 %v560
        %599 = vmatprep.subr.mxu0 0.0
        %600 = vmatpush1.msra.mxu0 %v561
        %601 = vmatprep.subr.mxu0 0.0
        %602 = vmatpush1.msra.mxu0 0.0
        %603 = vmatprep.subr.mxu0 0.0
        %604 = vmatpush1.msra.mxu0 0.0
        %605 = vmatprep.subr.mxu0 0.0
        %606 = vmatpush1.msra.mxu0 0.0
        %607 = vmatprep.subr.mxu0 0.0
        %608 = vmatpush1.msra.mxu0 0.0
        %609 = vmatprep.subr.mxu0 0.0
        %610 = vmatpush1.msra.mxu0 0.0
        %611 = vmatprep.subr.mxu0 0.0
        %612 = vmatpush1.msra.mxu0 0.0
        %613 = vmatprep.subr.mxu0 0.0
        %614 = vmatpush1.msra.mxu0 0.0
        %615 = vmatprep.subr.mxu0 0.0
        %616 = vmatpush1.msra.mxu0 0.0
        %617 = vmatprep.subr.mxu0 0.0
        %618 = vmatpush1.msra.mxu0 0.0
        %619 = vmatprep.subr.mxu0 0.0
        %620 = vmatpush1.msra.mxu0 0.0
        %621 = vmatprep.subr.mxu0 0.0
        %622 = vmatpush1.msra.mxu0 0.0
        %623 = vmatprep.subr.mxu0 0.0
        %624 = vmatpush1.msra.mxu0 0.0
        %625 = vmatprep.subr.mxu0 0.0
        %626 = vmatpush1.msra.mxu0 0.0
        %627 = vmatprep.subr.mxu0 0.0
        %628 = vmatpush1.msra.mxu0 0.0
        %629 = vmatprep.subr.mxu0 0.0
        %630 = vmatpush1.msra.mxu0 0.0
        %631 = vmatprep.subr.mxu0 0.0
        %632 = vmatpush1.msra.mxu0 0.0
        %633 = vmatprep.mubr.f32.mxu0 0.0
        %634 = vmatmul.mubr.f32.gmra.mrb[0].mxu0 %v530
        %v635 = vpop.f32.mrb[0].mxu0
        %v636 = vadd.f32 %v567, %v635
        %v637 = vpop.f32.mrb[0].mxu0
        %638 = vmatprep.mubr.f32.mxu0 0.0
        %639 = vmatmul.mubr.f32.gmra.mrb[0].mxu0 %v531
        %v640 = vpop.f32.mrb[0].mxu0
        %v641 = vadd.f32 %v567, %v640
        %v642 = vpop.f32.mrb[0].mxu0
        %643 = vmatprep.mubr.f32.mxu0 0.0
        %644 = vmatmul.mubr.f32.gmra.mrb[0].mxu0 %v532
        %v645 = vpop.f32.mrb[0].mxu0
        %v646 = vadd.f32 %v567, %v645
        %v647 = vpop.f32.mrb[0].mxu0
        %648 = vmatprep.mubr.f32.mxu0 0.0
        %649 = vmatmul.mubr.f32.gmra.mrb[0].mxu0 %v533
        %v650 = vpop.f32.mrb[0].mxu0
        %v651 = vadd.f32 %v567, %v650
        %v652 = vpop.f32.mrb[0].mxu0
        %653 = vmatprep.mubr.f32.mxu0 0.0
        %654 = vmatmul.mubr.f32.gmra.mrb[0].mxu0 %v534
        %v655 = vpop.f32.mrb[0].mxu0
        %v656 = vadd.f32 %v567, %v655
        %v657 = vpop.f32.mrb[0].mxu0
        %658 = vmatprep.mubr.f32.mxu0 0.0
        %659 = vmatmul.mubr.f32.gmra.mrb[0].mxu0 %v535
        %v660 = vpop.f32.mrb[0].mxu0
        %v661 = vadd.f32 %v567, %v660
        %v662 = vpop.f32.mrb[0].mxu0
        %663 = vmatprep.mubr.f32.mxu0 0.0
        %664 = vmatmul.mubr.f32.gmra.mrb[0].mxu0 %v536
        %v665 = vpop.f32.mrb[0].mxu0
        %v666 = vadd.f32 %v567, %v665
        %v667 = vpop.f32.mrb[0].mxu0
        %668 = vmatprep.mubr.f32.mxu0 0.0
        %669 = vmatmul.mubr.f32.gmra.mrb[0].mxu0 %v537
        %v670 = vpop.f32.mrb[0].mxu0
        %v671 = vadd.f32 %v567, %v670
        %v672 = vpop.f32.mrb[0].mxu0
        %673 = vmatprep.mubr.f32.mxu0 0.0
        %674 = vmatmul.mubr.f32.gmra.mrb[0].mxu0 %v538
        %v675 = vpop.f32.mrb[0].mxu0
        %v676 = vadd.f32 %v567, %v675
        %v677 = vpop.f32.mrb[0].mxu0
        %678 = vmatprep.mubr.f32.mxu0 0.0
        %679 = vmatmul.mubr.f32.gmra.mrb[0].mxu0 %v539
        %v680 = vpop.f32.mrb[0].mxu0
        %v681 = vadd.f32 %v567, %v680
        %v682 = vpop.f32.mrb[0].mxu0
        %683 = vmatprep.mubr.f32.mxu0 0.0
        %684 = vmatmul.mubr.f32.gmra.mrb[0].mxu0 %v540
        %v685 = vpop.f32.mrb[0].mxu0
        %v686 = vadd.f32 %v567, %v685
        %v687 = vpop.f32.mrb[0].mxu0
        %688 = vmatprep.mubr.f32.mxu0 0.0
        %689 = vmatmul.mubr.f32.gmra.mrb[0].mxu0 %v541
        %v690 = vpop.f32.mrb[0].mxu0
        %v691 = vadd.f32 %v567, %v690
        %v692 = vpop.f32.mrb[0].mxu0
        %693 = vmatprep.mubr.f32.mxu0 0.0
        %694 = vmatmul.mubr.f32.gmra.mrb[0].mxu0 %v542
        %v695 = vpop.f32.mrb[0].mxu0
        %v696 = vadd.f32 %v567, %v695
        %v697 = vpop.f32.mrb[0].mxu0
        %698 = vmatprep.mubr.f32.mxu0 0.0
        %699 = vmatmul.mubr.f32.gmra.mrb[0].mxu0 %v543
        %v700 = vpop.f32.mrb[0].mxu0
        %v701 = vadd.f32 %v567, %v700
        %v702 = vpop.f32.mrb[0].mxu0
        %703 = vmatprep.mubr.f32.mxu0 0.0
        %704 = vmatmul.mubr.f32.gmra.mrb[0].mxu0 %v544
        %v705 = vpop.f32.mrb[0].mxu0
        %v706 = vadd.f32 %v567, %v705
        %v707 = vpop.f32.mrb[0].mxu0
        %708 = vmatprep.mubr.f32.mxu0 0.0
        %709 = vmatmul.mubr.f32.gmra.mrb[0].mxu0 %v545
        %v710 = vpop.f32.mrb[0].mxu0
        %v711 = vadd.f32 %v567, %v710
        %v712 = vpop.f32.mrb[0].mxu0
        %713 = vdwg.mxu0
        %v714 = vmax.f32 %v636, 0.0
        %v715 = vmax.f32 %v641, 0.0
        %v716 = vmax.f32 %v646, 0.0
        %v717 = vmax.f32 %v651, 0.0
        %v718 = vmax.f32 %v656, 0.0
        %v719 = vmax.f32 %v661, 0.0
        %v720 = vmax.f32 %v666, 0.0
        %v721 = vmax.f32 %v671, 0.0
        %v722 = vmax.f32 %v676, 0.0
        %v723 = vmax.f32 %v681, 0.0
        %v724 = vmax.f32 %v686, 0.0
        %v725 = vmax.f32 %v691, 0.0
        %v726 = vmax.f32 %v696, 0.0
        %v727 = vmax.f32 %v701, 0.0
        %v728 = vmax.f32 %v706, 0.0
        %v729 = vmax.f32 %v711, 0.0
        %s730 = smul.u32 %s22, 2
        %s731 = sadd.s32 %s730, %s23
        %s732 = smul.u32 %s731, 128
        %v733 = vlaneseq
        %v734 = vshrl.u32 %v733, 7
        %v735 = vadd.s32 %v734, 8
        %v736 = vadd.s32 %v734, 16
        %v737 = vadd.s32 %v734, 24
        %v738 = vadd.s32 %v734, 32
        %v739 = vadd.s32 %v734, 40
        %v740 = vadd.s32 %v734, 48
        %v741 = vadd.s32 %v734, 56
        %v742 = vadd.s32 %v734, 64
        %v743 = vadd.s32 %v734, 72
        %v744 = vadd.s32 %v734, 80
        %v745 = vadd.s32 %v734, 88
        %v746 = vadd.s32 %v734, 96
        %v747 = vadd.s32 %v734, 104
        %v748 = vadd.s32 %v734, 112
        %v749 = vadd.s32 %v734, 120
        %v750 = vstv %s732
        %v751 = vadd.s32 %v750, %v734
        %v752 = vadd.s32 %v750, %v735
        %v753 = vadd.s32 %v750, %v736
        %v754 = vadd.s32 %v750, %v737
        %v755 = vadd.s32 %v750, %v738
        %v756 = vadd.s32 %v750, %v739
        %v757 = vadd.s32 %v750, %v740
        %v758 = vadd.s32 %v750, %v741
        %v759 = vadd.s32 %v750, %v742
        %v760 = vadd.s32 %v750, %v743
        %v761 = vadd.s32 %v750, %v744
        %v762 = vadd.s32 %v750, %v745
        %v763 = vadd.s32 %v750, %v746
        %v764 = vadd.s32 %v750, %v747
        %v765 = vadd.s32 %v750, %v748
        %v766 = vadd.s32 %v750, %v749
        %vm767 = vcmp.lt.s32.totalorder %v751, 200
        %vm768 = vcmp.lt.s32.totalorder %v752, 200
        %vm769 = vcmp.lt.s32.totalorder %v753, 200
        %vm770 = vcmp.lt.s32.totalorder %v754, 200
        %vm771 = vcmp.lt.s32.totalorder %v755, 200
        %vm772 = vcmp.lt.s32.totalorder %v756, 200
        %vm773 = vcmp.lt.s32.totalorder %v757, 200
        %vm774 = vcmp.lt.s32.totalorder %v758, 200
        %vm775 = vcmp.lt.s32.totalorder %v759, 200
        %vm776 = vcmp.lt.s32.totalorder %v760, 200
        %vm777 = vcmp.lt.s32.totalorder %v761, 200
        %vm778 = vcmp.lt.s32.totalorder %v762, 200
        %vm779 = vcmp.lt.s32.totalorder %v763, 200
        %vm780 = vcmp.lt.s32.totalorder %v764, 200
        %vm781 = vcmp.lt.s32.totalorder %v765, 200
        %vm782 = vcmp.lt.s32.totalorder %v766, 200
        %v783 = vsel %vm767, 1, 0
        %v784 = vsel %vm768, 1, 0
        %v785 = vsel %vm769, 1, 0
        %v786 = vsel %vm770, 1, 0
        %v787 = vsel %vm771, 1, 0
        %v788 = vsel %vm772, 1, 0
        %v789 = vsel %vm773, 1, 0
        %v790 = vsel %vm774, 1, 0
        %v791 = vsel %vm775, 1, 0
        %v792 = vsel %vm776, 1, 0
        %v793 = vsel %vm777, 1, 0
        %v794 = vsel %vm778, 1, 0
        %v795 = vsel %vm779, 1, 0
        %v796 = vsel %vm780, 1, 0
        %v797 = vsel %vm781, 1, 0
        %v798 = vsel %vm782, 1, 0
        %vm799 = vcmp.eq.s32.totalorder %v783, 1
        %vm800 = vcmp.eq.s32.totalorder %v784, 1
        %vm801 = vcmp.eq.s32.totalorder %v785, 1
        %vm802 = vcmp.eq.s32.totalorder %v786, 1
        %vm803 = vcmp.eq.s32.totalorder %v787, 1
        %vm804 = vcmp.eq.s32.totalorder %v788, 1
        %vm805 = vcmp.eq.s32.totalorder %v789, 1
        %vm806 = vcmp.eq.s32.totalorder %v790, 1
        %vm807 = vcmp.eq.s32.totalorder %v791, 1
        %vm808 = vcmp.eq.s32.totalorder %v792, 1
        %vm809 = vcmp.eq.s32.totalorder %v793, 1
        %vm810 = vcmp.eq.s32.totalorder %v794, 1
        %vm811 = vcmp.eq.s32.totalorder %v795, 1
        %vm812 = vcmp.eq.s32.totalorder %v796, 1
        %vm813 = vcmp.eq.s32.totalorder %v797, 1
        %vm814 = vcmp.eq.s32.totalorder %v798, 1
        %v815 = vsel %vm799, %v714, 0.0
        %v816 = vsel %vm800, %v715, 0.0
        %v817 = vsel %vm801, %v716, 0.0
        %v818 = vsel %vm802, %v717, 0.0
        %v819 = vsel %vm803, %v718, 0.0
        %v820 = vsel %vm804, %v719, 0.0
        %v821 = vsel %vm805, %v720, 0.0
        %v822 = vsel %vm806, %v721, 0.0
        %v823 = vsel %vm807, %v722, 0.0
        %v824 = vsel %vm808, %v723, 0.0
        %v825 = vsel %vm809, %v724, 0.0
        %v826 = vsel %vm810, %v725, 0.0
        %v827 = vsel %vm811, %v726, 0.0
        %v828 = vsel %vm812, %v727, 0.0
        %v829 = vsel %vm813, %v728, 0.0
        %v830 = vsel %vm814, %v729, 0.0
        %v831 = vld [vmem:[%s303] sm:$0xff]
        %v832 = vld [vmem:[%s303 + $0x8] sm:$0xff]
        %v833 = vld [vmem:[%s303 + $0x10] sm:$0xff]
        %v834 = vld [vmem:[%s303 + $0x18] sm:$0xff]
        %v835 = vld [vmem:[%s303 + $0x20] sm:$0xff]
        %v836 = vld [vmem:[%s303 + $0x28] sm:$0xff]
        %v837 = vld [vmem:[%s303 + $0x30] sm:$0xff]
        %v838 = vld [vmem:[%s303 + $0x38] sm:$0xff]
        %v839 = vld [vmem:[%s303 + $0x40] sm:$0xff]
        %v840 = vld [vmem:[%s303 + $0x48] sm:$0xff]
        %v841 = vld [vmem:[%s303 + $0x50] sm:$0xff]
        %v842 = vld [vmem:[%s303 + $0x58] sm:$0xff]
        %v843 = vld [vmem:[%s303 + $0x60] sm:$0xff]
        %v844 = vld [vmem:[%s303 + $0x68] sm:$0xff]
        %v845 = vld [vmem:[%s303 + $0x70] sm:$0xff]
        %v846 = vld [vmem:[%s303 + $0x78] sm:$0xff]
        %vm847 = vcmp.eq.s32.totalorder %v831, 0
        %vm848 = vcmp.eq.s32.totalorder %v832, 0
        %vm849 = vcmp.eq.s32.totalorder %v833, 0
        %vm850 = vcmp.eq.s32.totalorder %v834, 0
        %vm851 = vcmp.eq.s32.totalorder %v835, 0
        %vm852 = vcmp.eq.s32.totalorder %v836, 0
        %vm853 = vcmp.eq.s32.totalorder %v837, 0
        %vm854 = vcmp.eq.s32.totalorder %v838, 0
        %vm855 = vcmp.eq.s32.totalorder %v839, 0
        %vm856 = vcmp.eq.s32.totalorder %v840, 0
        %vm857 = vcmp.eq.s32.totalorder %v841, 0
        %vm858 = vcmp.eq.s32.totalorder %v842, 0
        %vm859 = vcmp.eq.s32.totalorder %v843, 0
        %vm860 = vcmp.eq.s32.totalorder %v844, 0
        %vm861 = vcmp.eq.s32.totalorder %v845, 0
        %vm862 = vcmp.eq.s32.totalorder %v846, 0
        %v863 = vsel %vm847, 1, 0
        %v864 = vsel %vm848, 1, 0
        %v865 = vsel %vm849, 1, 0
        %v866 = vsel %vm850, 1, 0
        %v867 = vsel %vm851, 1, 0
        %v868 = vsel %vm852, 1, 0
        %v869 = vsel %vm853, 1, 0
        %v870 = vsel %vm854, 1, 0
        %v871 = vsel %vm855, 1, 0
        %v872 = vsel %vm856, 1, 0
        %v873 = vsel %vm857, 1, 0
        %v874 = vsel %vm858, 1, 0
        %v875 = vsel %vm859, 1, 0
        %v876 = vsel %vm860, 1, 0
        %v877 = vsel %vm861, 1, 0
        %v878 = vsel %vm862, 1, 0
        %879 = vset.pattern.permute.xlu0 0
        %880 = vperm.xlu0 %879, %v863
        %v881 = vpop.permute.xlu0 %880
        %882 = vset.pattern.permute.xlu0 0
        %883 = vperm.xlu0 %882, %v864
        %v884 = vpop.permute.xlu0 %883
        %885 = vset.pattern.permute.xlu0 0
        %886 = vperm.xlu0 %885, %v865
        %v887 = vpop.permute.xlu0 %886
        %888 = vset.pattern.permute.xlu0 0
        %889 = vperm.xlu0 %888, %v866
        %v890 = vpop.permute.xlu0 %889
        %891 = vset.pattern.permute.xlu0 0
        %892 = vperm.xlu0 %891, %v867
        %v893 = vpop.permute.xlu0 %892
        %894 = vset.pattern.permute.xlu0 0
        %895 = vperm.xlu0 %894, %v868
        %v896 = vpop.permute.xlu0 %895
        %897 = vset.pattern.permute.xlu0 0
        %898 = vperm.xlu0 %897, %v869
        %v899 = vpop.permute.xlu0 %898
        %900 = vset.pattern.permute.xlu0 0
        %901 = vperm.xlu0 %900, %v870
        %v902 = vpop.permute.xlu0 %901
        %903 = vset.pattern.permute.xlu0 0
        %904 = vperm.xlu0 %903, %v871
        %v905 = vpop.permute.xlu0 %904
        %906 = vset.pattern.permute.xlu0 0
        %907 = vperm.xlu0 %906, %v872
        %v908 = vpop.permute.xlu0 %907
        %909 = vset.pattern.permute.xlu0 0
        %910 = vperm.xlu0 %909, %v873
        %v911 = vpop.permute.xlu0 %910
        %912 = vset.pattern.permute.xlu0 0
        %913 = vperm.xlu0 %912, %v874
        %v914 = vpop.permute.xlu0 %913
        %915 = vset.pattern.permute.xlu0 0
        %916 = vperm.xlu0 %915, %v875
        %v917 = vpop.permute.xlu0 %916
        %918 = vset.pattern.permute.xlu0 0
        %919 = vperm.xlu0 %918, %v876
        %v920 = vpop.permute.xlu0 %919
        %921 = vset.pattern.permute.xlu0 0
        %922 = vperm.xlu0 %921, %v877
        %v923 = vpop.permute.xlu0 %922
        %924 = vset.pattern.permute.xlu0 0
        %925 = vperm.xlu0 %924, %v878
        %v926 = vpop.permute.xlu0 %925
        %vm927 = vcmp.eq.s32.totalorder %v881, 1
        %vm928 = vcmp.eq.s32.totalorder %v884, 1
        %vm929 = vcmp.eq.s32.totalorder %v887, 1
        %vm930 = vcmp.eq.s32.totalorder %v890, 1
        %vm931 = vcmp.eq.s32.totalorder %v893, 1
        %vm932 = vcmp.eq.s32.totalorder %v896, 1
        %vm933 = vcmp.eq.s32.totalorder %v899, 1
        %vm934 = vcmp.eq.s32.totalorder %v902, 1
        %vm935 = vcmp.eq.s32.totalorder %v905, 1
        %vm936 = vcmp.eq.s32.totalorder %v908, 1
        %vm937 = vcmp.eq.s32.totalorder %v911, 1
        %vm938 = vcmp.eq.s32.totalorder %v914, 1
        %vm939 = vcmp.eq.s32.totalorder %v917, 1
        %vm940 = vcmp.eq.s32.totalorder %v920, 1
        %vm941 = vcmp.eq.s32.totalorder %v923, 1
        %vm942 = vcmp.eq.s32.totalorder %v926, 1
        %v943 = vsel %vm927, %v815, 0.0
        %v944 = vsel %vm928, %v816, 0.0
        %v945 = vsel %vm929, %v817, 0.0
        %v946 = vsel %vm930, %v818, 0.0
        %v947 = vsel %vm931, %v819, 0.0
        %v948 = vsel %vm932, %v820, 0.0
        %v949 = vsel %vm933, %v821, 0.0
        %v950 = vsel %vm934, %v822, 0.0
        %v951 = vsel %vm935, %v823, 0.0
        %v952 = vsel %vm936, %v824, 0.0
        %v953 = vsel %vm937, %v825, 0.0
        %v954 = vsel %vm938, %v826, 0.0
        %v955 = vsel %vm939, %v827, 0.0
        %v956 = vsel %vm940, %v828, 0.0
        %v957 = vsel %vm941, %v829, 0.0
        %v958 = vsel %vm942, %v830, 0.0
        %v959 = vmax.f32 %v943, %v947
        %v960 = vmax.f32 %v944, %v948
        %v961 = vmax.f32 %v945, %v949
        %v962 = vmax.f32 %v946, %v950
        %v963 = vmax.f32 %v959, %v951
        %v964 = vmax.f32 %v960, %v952
        %v965 = vmax.f32 %v961, %v953
        %v966 = vmax.f32 %v962, %v954
        %v967 = vmax.f32 %v963, %v955
        %v968 = vmax.f32 %v964, %v956
        %v969 = vmax.f32 %v965, %v957
        %v970 = vmax.f32 %v966, %v958
        %v971 = vmax.f32 %v967, %v968
        %v972 = vmax.f32 %v969, %v970
        %v973 = vmax.f32 %v971, %v972
        %v974 = vrot.slane %v973, 4
        %v975 = vmax.f32 %v973, %v974
        %v976 = vrot.slane %v975, 2
        %v977 = vmax.f32 %v975, %v976
        %v978 = vrot.slane %v977, 1
        %v979 = vmax.f32 %v977, %v978
        %v980 = vmax.f32 %v979, 0.0
        %vm981 = vcmp.eq.s32.totalorder %v831, 1
        %vm982 = vcmp.eq.s32.totalorder %v832, 1
        %vm983 = vcmp.eq.s32.totalorder %v833, 1
        %vm984 = vcmp.eq.s32.totalorder %v834, 1
        %vm985 = vcmp.eq.s32.totalorder %v835, 1
        %vm986 = vcmp.eq.s32.totalorder %v836, 1
        %vm987 = vcmp.eq.s32.totalorder %v837, 1
        %vm988 = vcmp.eq.s32.totalorder %v838, 1
        %vm989 = vcmp.eq.s32.totalorder %v839, 1
        %vm990 = vcmp.eq.s32.totalorder %v840, 1
        %vm991 = vcmp.eq.s32.totalorder %v841, 1
        %vm992 = vcmp.eq.s32.totalorder %v842, 1
        %vm993 = vcmp.eq.s32.totalorder %v843, 1
        %vm994 = vcmp.eq.s32.totalorder %v844, 1
        %vm995 = vcmp.eq.s32.totalorder %v845, 1
        %vm996 = vcmp.eq.s32.totalorder %v846, 1
        %v997 = vsel %vm981, 1, 0
        %v998 = vsel %vm982, 1, 0
        %v999 = vsel %vm983, 1, 0
        %v1000 = vsel %vm984, 1, 0
        %v1001 = vsel %vm985, 1, 0
        %v1002 = vsel %vm986, 1, 0
        %v1003 = vsel %vm987, 1, 0
        %v1004 = vsel %vm988, 1, 0
        %v1005 = vsel %vm989, 1, 0
        %v1006 = vsel %vm990, 1, 0
        %v1007 = vsel %vm991, 1, 0
        %v1008 = vsel %vm992, 1, 0
        %v1009 = vsel %vm993, 1, 0
        %v1010 = vsel %vm994, 1, 0
        %v1011 = vsel %vm995, 1, 0
        %v1012 = vsel %vm996, 1, 0
        %1013 = vset.pattern.permute.xlu0 0
        %1014 = vperm.xlu0 %1013, %v997
        %v1015 = vpop.permute.xlu0 %1014
        %1016 = vset.pattern.permute.xlu0 0
        %1017 = vperm.xlu0 %1016, %v998
        %v1018 = vpop.permute.xlu0 %1017
        %1019 = vset.pattern.permute.xlu0 0
        %1020 = vperm.xlu0 %1019, %v999
        %v1021 = vpop.permute.xlu0 %1020
        %1022 = vset.pattern.permute.xlu0 0
        %1023 = vperm.xlu0 %1022, %v1000
        %v1024 = vpop.permute.xlu0 %1023
        %1025 = vset.pattern.permute.xlu0 0
        %1026 = vperm.xlu0 %1025, %v1001
        %v1027 = vpop.permute.xlu0 %1026
        %1028 = vset.pattern.permute.xlu0 0
        %1029 = vperm.xlu0 %1028, %v1002
        %v1030 = vpop.permute.xlu0 %1029
        %1031 = vset.pattern.permute.xlu0 0
        %1032 = vperm.xlu0 %1031, %v1003
        %v1033 = vpop.permute.xlu0 %1032
        %1034 = vset.pattern.permute.xlu0 0
        %1035 = vperm.xlu0 %1034, %v1004
        %v1036 = vpop.permute.xlu0 %1035
        %1037 = vset.pattern.permute.xlu0 0
        %1038 = vperm.xlu0 %1037, %v1005
        %v1039 = vpop.permute.xlu0 %1038
        %1040 = vset.pattern.permute.xlu0 0
        %1041 = vperm.xlu0 %1040, %v1006
        %v1042 = vpop.permute.xlu0 %1041
        %1043 = vset.pattern.permute.xlu0 0
        %1044 = vperm.xlu0 %1043, %v1007
        %v1045 = vpop.permute.xlu0 %1044
        %1046 = vset.pattern.permute.xlu0 0
        %1047 = vperm.xlu0 %1046, %v1008
        %v1048 = vpop.permute.xlu0 %1047
        %1049 = vset.pattern.permute.xlu0 0
        %1050 = vperm.xlu0 %1049, %v1009
        %v1051 = vpop.permute.xlu0 %1050
        %1052 = vset.pattern.permute.xlu0 0
        %1053 = vperm.xlu0 %1052, %v1010
        %v1054 = vpop.permute.xlu0 %1053
        %1055 = vset.pattern.permute.xlu0 0
        %1056 = vperm.xlu0 %1055, %v1011
        %v1057 = vpop.permute.xlu0 %1056
        %1058 = vset.pattern.permute.xlu0 0
        %1059 = vperm.xlu0 %1058, %v1012
        %v1060 = vpop.permute.xlu0 %1059
        %vm1061 = vcmp.eq.s32.totalorder %v1015, 1
        %vm1062 = vcmp.eq.s32.totalorder %v1018, 1
        %vm1063 = vcmp.eq.s32.totalorder %v1021, 1
        %vm1064 = vcmp.eq.s32.totalorder %v1024, 1
        %vm1065 = vcmp.eq.s32.totalorder %v1027, 1
        %vm1066 = vcmp.eq.s32.totalorder %v1030, 1
        %vm1067 = vcmp.eq.s32.totalorder %v1033, 1
        %vm1068 = vcmp.eq.s32.totalorder %v1036, 1
        %vm1069 = vcmp.eq.s32.totalorder %v1039, 1
        %vm1070 = vcmp.eq.s32.totalorder %v1042, 1
        %vm1071 = vcmp.eq.s32.totalorder %v1045, 1
        %vm1072 = vcmp.eq.s32.totalorder %v1048, 1
        %vm1073 = vcmp.eq.s32.totalorder %v1051, 1
        %vm1074 = vcmp.eq.s32.totalorder %v1054, 1
        %vm1075 = vcmp.eq.s32.totalorder %v1057, 1
        %vm1076 = vcmp.eq.s32.totalorder %v1060, 1
        %v1077 = vsel %vm1061, %v815, 0.0
        %v1078 = vsel %vm1062, %v816, 0.0
        %v1079 = vsel %vm1063, %v817, 0.0
        %v1080 = vsel %vm1064, %v818, 0.0
        %v1081 = vsel %vm1065, %v819, 0.0
        %v1082 = vsel %vm1066, %v820, 0.0
        %v1083 = vsel %vm1067, %v821, 0.0
        %v1084 = vsel %vm1068, %v822, 0.0
        %v1085 = vsel %vm1069, %v823, 0.0
        %v1086 = vsel %vm1070, %v824, 0.0
        %v1087 = vsel %vm1071, %v825, 0.0
        %v1088 = vsel %vm1072, %v826, 0.0
        %v1089 = vsel %vm1073, %v827, 0.0
        %v1090 = vsel %vm1074, %v828, 0.0
        %v1091 = vsel %vm1075, %v829, 0.0
        %v1092 = vsel %vm1076, %v830, 0.0
        %v1093 = vmax.f32 %v1077, %v1081
        %v1094 = vmax.f32 %v1078, %v1082
        %v1095 = vmax.f32 %v1079, %v1083
        %v1096 = vmax.f32 %v1080, %v1084
        %v1097 = vmax.f32 %v1093, %v1085
        %v1098 = vmax.f32 %v1094, %v1086
        %v1099 = vmax.f32 %v1095, %v1087
        %v1100 = vmax.f32 %v1096, %v1088
        %v1101 = vmax.f32 %v1097, %v1089
        %v1102 = vmax.f32 %v1098, %v1090
        %v1103 = vmax.f32 %v1099, %v1091
        %v1104 = vmax.f32 %v1100, %v1092
        %v1105 = vmax.f32 %v1101, %v1102
        %v1106 = vmax.f32 %v1103, %v1104
        %v1107 = vmax.f32 %v1105, %v1106
        %v1108 = vrot.slane %v1107, 4
        %v1109 = vmax.f32 %v1107, %v1108
        %v1110 = vrot.slane %v1109, 2
        %v1111 = vmax.f32 %v1109, %v1110
        %v1112 = vrot.slane %v1111, 1
        %v1113 = vmax.f32 %v1111, %v1112
        %v1114 = vmax.f32 %v1113, 0.0
        %v1115 = vld [vmem:[#allocation2] sm:$0x1]
        %v1116 = vmax.f32 %v1115, %v980
        %1117 = vst [vmem:[#allocation2] sm:$0x1] %v1116
        %v1118 = vld [vmem:[#allocation2 + $0x1] sm:$0x1]
        %v1119 = vmax.f32 %v1118, %v1114
        %1120 = vst [vmem:[#allocation2 + $0x1] sm:$0x1] %v1119
        // Predicated region
        $region49: #{tpu_custom_call.1} parent=43 // pred_check
          %p1121 = pneg %p192
        $region50: #{tpu_custom_call.1} parent=43 // pred_check_branch
          %1123 = sbr.rel (%p1121) target = $region52
        $region51: #{tpu_custom_call.1} parent=43 // pred_region
          %s1125 = ssub.s32 128, 128
          %1126 = vsyncadd [#allocation3], %s1125
          %s1127 = smul.addr %s22, 128
          %s1128 = scalar_lea.hbm %s6, %s1127
          %s1130 = sshll.u32 [#allocation2], 4
          %s1131 = int_to_ptr.vmem [resolvable:$true] %s1130
          %1133 = dma.vmem_to_hbm [thread:$0]  %s1131, 128, %s1128, [#allocation3]
        $region52: #{tpu_custom_call.1} parent=43 // pred_fallthru
          _
        // Predicated region
        $region53: #{tpu_custom_call.1} parent=43 // pred_check
          %p1134 = pneg %p192
        $region54: #{tpu_custom_call.1} parent=43 // pred_check_branch
          %1136 = sbr.rel (%p1134) target = $region56
        $region55: #{tpu_custom_call.1} parent=43 // pred_region
          %1137 = dma.done [#allocation3], 128
        $region56: #{tpu_custom_call.1} parent=43 // pred_fallthru
          _
      $region44: #{tpu_custom_call.1} parent=5 // pred_fallthru
        _
      %p1138 = scmp.le.s32.totalorder 2, %s13
      // Predicated region
      $region57: #{tpu_custom_call.1} parent=5 // pred_check
        %p1139 = pneg %p1138
      $region58: #{tpu_custom_call.1} parent=5 // pred_check_branch
        %1141 = sbr.rel (%p1139) target = $region60
      $region59: #{tpu_custom_call.1} parent=5 // pred_region
        %s1142 = ssub.s32 %s13, 2
      $region60: #{tpu_custom_call.1} parent=5 // pred_fallthru
        _
    $region6: #{tpu_custom_call.1} parent=1 // loop_footer
      %s17 = sadd.s32 1, %s13
    $region7: #{tpu_custom_call.1} parent=1 // loop_footer_branch
      %12 = sbr.rel target = $region3
    $region8: #{tpu_custom_call.1} parent=1 // loop_exit
      _
    %1143 = vsyncpa [#allocation3], 1
    %s1144 = scalar_lea.sflag [#allocation3], 1
    %1145 = vsyncpa %s1144, 1

</llo_original>
